<compile_context>
chip_gen: v6e
topology: v6e:2x2x1
jax: 0.10.0
libtpu: 0.0.40
codegen_flags: <defaults>
</compile_context>

<pallas_src>
import math
import jax
import jax.numpy as jnp
from jax.experimental import pallas as pl
from jax.experimental.pallas import tpu as pltpu


def _gelu_exact(x):
    # Matches torch.nn.GELU() default (erf-based, not tanh approximation).
    return 0.5 * x * (1.0 + jax.lax.erf(x * (1.0 / math.sqrt(2.0))))


def _round_up(a, b):
    return ((a + b - 1) // b) * b


# ----------------------------------------------------------------------------
# Single-chunk kernel: whole d_ff resident, no scratch accumulator.
# ----------------------------------------------------------------------------
def ffn_kernel_single(x_ref, w1_ref, b1_ref, w2_ref, b2_ref, o_ref):
    # x_ref: (tm, d_model)  w1_ref: (d_model, d_ff)  b1_ref: (1, d_ff)
    # w2_ref: (d_ff, d_out) b2_ref: (1, d_out)       o_ref: (tm, d_out)
    h = jnp.dot(x_ref[...], w1_ref[...], preferred_element_type=jnp.float32)
    h = _gelu_exact(h + b1_ref[...])
    # TODO(synk): dropout omitted (identity at inference); training-mode dropout
    # would use pltpu.prng_seed + pltpu.prng_random_bits for an in-kernel mask.
    y = jnp.dot(h.astype(w2_ref.dtype), w2_ref[...],
                preferred_element_type=jnp.float32)
    o_ref[...] = (y + b2_ref[...]).astype(o_ref.dtype)


# ----------------------------------------------------------------------------
# Chunked-d_ff kernel: streamed reduction over d_ff with f32 accumulator.
# ----------------------------------------------------------------------------
def ffn_kernel_chunked(x_ref, w1_ref, b1_ref, w2_ref, b2_ref, o_ref, acc_ref):
    # x_ref:  (tm, d_model)  w1_ref: (d_model, tf)  b1_ref: (1, tf)
    # w2_ref: (tf, d_out)    b2_ref: (1, d_out)
    # o_ref:  (tm, d_out)    acc_ref: (tm, d_out) f32 scratch
    j = pl.program_id(1)

    @pl.when(j == 0)
    def _():
        acc_ref[...] = jnp.zeros_like(acc_ref)

    h = jnp.dot(x_ref[...], w1_ref[...], preferred_element_type=jnp.float32)
    h = _gelu_exact(h + b1_ref[...])
    # TODO(synk): dropout omitted (identity at inference).

    acc_ref[...] += jnp.dot(h.astype(w2_ref.dtype), w2_ref[...],
                            preferred_element_type=jnp.float32)

    @pl.when(j == pl.num_programs(1) - 1)
    def _():
        # b2 added exactly once, in the epilogue.
        o_ref[...] = (acc_ref[...] + b2_ref[...]).astype(o_ref.dtype)


def positionwise_feed_forward(x, w1, b1, w2, b2, *, tm=512, tf=512,
                              vmem_limit_bytes=48 * 1024 * 1024):
    """x: (batch, seq, d_model). w1: (d_model, d_ff), w2: (d_ff, d_out).

    tm: row tile over batch*seq (clipped to the problem, padded if needed).
    tf: d_ff chunk size (streamed reduction axis; rounded to a 128 multiple
        and d_ff zero-padded when chunking — zero pad contributes GELU(0)*0).
    """
    batch, seq, d_model = x.shape
    d_ff = w1.shape[1]
    d_out = w2.shape[1]
    M = batch * seq

    # Effective row tile: as large as requested, never larger than (8-rounded) M.
    tm_eff = min(tm, _round_up(M, 8))
    M_pad = _round_up(M, tm_eff)

    x2 = x.reshape(M, d_model)
    if M_pad != M:
        x2 = jnp.pad(x2, ((0, M_pad - M), (0, 0)))

    # Lane-dense output: pad d_out to a 128 multiple (pad cols sliced off later).
    d_out_pad = _round_up(d_out, 128)
    w2p, b2p = w2, b2
    if d_out_pad != d_out:
        w2p = jnp.pad(w2p, ((0, 0), (0, d_out_pad - d_out)))
        b2p = jnp.pad(b2p, ((0, d_out_pad - d_out),))
    b2_2 = b2p.reshape(1, d_out_pad)

    single_chunk = d_ff <= tf

    if single_chunk:
        b1_2 = b1.reshape(1, d_ff)
        grid = (M_pad // tm_eff,)
        out = pl.pallas_call(
            ffn_kernel_single,
            out_shape=jax.ShapeDtypeStruct((M_pad, d_out_pad), x.dtype),
            grid_spec=pltpu.PrefetchScalarGridSpec(
                num_scalar_prefetch=0,
                grid=grid,
                in_specs=[
                    pl.BlockSpec((tm_eff, d_model), lambda i: (i, 0)),   # x rows
                    pl.BlockSpec((d_model, d_ff), lambda i: (0, 0)),     # W1 (resident)
                    pl.BlockSpec((1, d_ff), lambda i: (0, 0)),           # b1
                    pl.BlockSpec((d_ff, d_out_pad), lambda i: (0, 0)),   # W2 (resident)
                    pl.BlockSpec((1, d_out_pad), lambda i: (0, 0)),      # b2
                ],
                out_specs=pl.BlockSpec((tm_eff, d_out_pad), lambda i: (i, 0)),
            ),
            compiler_params=pltpu.CompilerParams(
                dimension_semantics=("parallel",),
                vmem_limit_bytes=vmem_limit_bytes),
        )(x2, w1, b1_2, w2p, b2_2)
    else:
        # Chunk size must be lane-aligned (128 multiple) since it is the lane
        # dim of the W1 block and the sublane dim of the W2 block.
        tf_eff = max(128, (tf // 128) * 128)
        d_ff_pad = _round_up(d_ff, tf_eff)

        w1p, b1p, w2pp = w1, b1, w2p
        if d_ff_pad != d_ff:
            pad = d_ff_pad - d_ff
            w1p = jnp.pad(w1p, ((0, 0), (0, pad)))
            b1p = jnp.pad(b1p, ((0, pad),))
            w2pp = jnp.pad(w2pp, ((0, pad), (0, 0)))
        b1_2 = b1p.reshape(1, d_ff_pad)

        grid = (M_pad // tm_eff, d_ff_pad // tf_eff)
        out = pl.pallas_call(
            ffn_kernel_chunked,
            out_shape=jax.ShapeDtypeStruct((M_pad, d_out_pad), x.dtype),
            grid_spec=pltpu.PrefetchScalarGridSpec(
                num_scalar_prefetch=0,
                grid=grid,
                in_specs=[
                    pl.BlockSpec((tm_eff, d_model), lambda i, j: (i, 0)),   # x rows
                    pl.BlockSpec((d_model, tf_eff), lambda i, j: (0, j)),   # W1 cols
                    pl.BlockSpec((1, tf_eff), lambda i, j: (0, j)),         # b1 slice
                    pl.BlockSpec((tf_eff, d_out_pad), lambda i, j: (j, 0)), # W2 rows
                    pl.BlockSpec((1, d_out_pad), lambda i, j: (0, 0)),      # b2
                ],
                out_specs=pl.BlockSpec((tm_eff, d_out_pad), lambda i, j: (i, 0)),
                scratch_shapes=[pltpu.VMEM((tm_eff, d_out_pad), jnp.float32)],
            ),
            compiler_params=pltpu.CompilerParams(
                dimension_semantics=("parallel", "arbitrary"),
                vmem_limit_bytes=vmem_limit_bytes),
        )(x2, w1p, b1_2, w2pp, b2_2)

    out = out[:M, :d_out]
    return out.reshape(batch, seq, d_out)


def _reference(x, w1, b1, w2, b2):
    h = jnp.dot(x, w1) + b1
    h = _gelu_exact(h)
    return jnp.dot(h, w2) + b2


def _make_inputs(key, batch, seq, d_model, d_ff, d_out):
    kx, kw1, kb1, kw2, kb2 = jax.random.split(key, 5)
    x = jax.random.normal(kx, (batch, seq, d_model), dtype=jnp.float32)
    # nn.Linear-style uniform init, deterministic via PRNGKey splits.
    lim1 = 1.0 / math.sqrt(d_model)
    lim2 = 1.0 / math.sqrt(d_ff)
    w1 = jax.random.uniform(kw1, (d_model, d_ff), jnp.float32, -lim1, lim1)
    b1 = jax.random.uniform(kb1, (d_ff,), jnp.float32, -lim1, lim1)
    w2 = jax.random.uniform(kw2, (d_ff, d_out), jnp.float32, -lim2, lim2)
    b2 = jax.random.uniform(kb2, (d_out,), jnp.float32, -lim2, lim2)
    return x, w1, b1, w2, b2


if __name__ == "__main__":
    key = jax.random.PRNGKey(0)
    k1, k2, k3 = jax.random.split(key, 3)

    # Case 1: module-spec small shapes — single d_ff chunk, tm clipped to M,
    # d_out padded to 128 for a lane-dense store then sliced back.
    batch, seq, d_model, d_ff = 2, 8, 32, 64
    d_out = d_model
    x, w1, b1, w2, b2 = _make_inputs(k1, batch, seq, d_model, d_ff, d_out)
    y = positionwise_feed_forward(x, w1, b1, w2, b2)
    y = jax.block_until_ready(y)
    y_ref = _reference(x, w1, b1, w2, b2)
    assert y.shape == (batch, seq, d_out)
    assert jnp.allclose(y, y_ref, atol=1e-5, rtol=1e-5)

    # Case 2: lane-dense 128-multiple dims exercising the chunked d_ff
    # reduction (3 chunks) and the accumulator init/finalize path.
    batch, seq, d_model, d_ff = 2, 64, 128, 384
    d_out = d_model
    x, w1, b1, w2, b2 = _make_inputs(k2, batch, seq, d_model, d_ff, d_out)
    y = positionwise_feed_forward(x, w1, b1, w2, b2, tm=128, tf=128)
    y = jax.block_until_ready(y)
    y_ref = _reference(x, w1, b1, w2, b2)
    assert y.shape == (batch, seq, d_out)
    assert jnp.allclose(y, y_ref, atol=1e-4, rtol=1e-4)

    # Case 3: chunked d_ff (2 chunks) + non-128 d_out (exercises d_out padding
    # in the accumulator path and the final column slice).
    batch, seq, d_model, d_ff, d_out = 2, 64, 128, 256, 96
    x, w1, b1, w2, b2 = _make_inputs(k3, batch, seq, d_model, d_ff, d_out)
    y = positionwise_feed_forward(x, w1, b1, w2, b2, tm=64, tf=128)
    y = jax.block_until_ready(y)
    y_ref = _reference(x, w1, b1, w2, b2)
    assert y.shape == (batch, seq, d_out)
    assert jnp.allclose(y, y_ref, atol=1e-4, rtol=1e-4)

    print("KERNEL_OK")
</pallas_src>

<mosaic_0001>
module attributes {stable_mosaic.version = 11 : i64} {
  func.func @ffn_kernel_single(%arg0: i32, %arg1: memref<16x32xf32, #tpu.memory_space<vmem>>, %arg2: memref<32x64xf32, #tpu.memory_space<vmem>>, %arg3: memref<1x64xf32, #tpu.memory_space<vmem>>, %arg4: memref<64x128xf32, #tpu.memory_space<vmem>>, %arg5: memref<1x128xf32, #tpu.memory_space<vmem>>, %arg6: memref<16x128xf32, #tpu.memory_space<vmem>>) attributes {dimension_semantics = [#tpu.dimension_semantics<parallel>], iteration_bounds = array<i64: 1>, scalar_prefetch = 0 : i64, scratch_operands = 0 : i64, tpu.core_type = #tpu.core_type<tc>, window_params = [{transform_indices = @transform_0, window_bounds = array<i64: 16, 32>}, {pipeline_mode = #tpu.pipeline_mode<synchronous>, transform_indices = @transform_1, window_bounds = array<i64: 32, 64>}, {pipeline_mode = #tpu.pipeline_mode<synchronous>, transform_indices = @transform_2, window_bounds = array<i64: 1, 64>}, {pipeline_mode = #tpu.pipeline_mode<synchronous>, transform_indices = @transform_3, window_bounds = array<i64: 64, 128>}, {pipeline_mode = #tpu.pipeline_mode<synchronous>, transform_indices = @transform_4, window_bounds = array<i64: 1, 128>}, {transform_indices = @transform_5, window_bounds = array<i64: 16, 128>}]} {
    %c0 = arith.constant 0 : index
    %c0_0 = arith.constant 0 : index
    %0 = vector.load %arg1[%c0, %c0_0] : memref<16x32xf32, #tpu.memory_space<vmem>>, vector<16x32xf32>
    %c0_1 = arith.constant 0 : index
    %c0_2 = arith.constant 0 : index
    %1 = vector.load %arg2[%c0_1, %c0_2] : memref<32x64xf32, #tpu.memory_space<vmem>>, vector<32x64xf32>
    %cst = arith.constant dense<0.000000e+00> : vector<16x64xf32>
    %2 = tpu.matmul %0, %1, %cst {dimension_numbers = #tpu.dot_dimension_numbers<[1], [0], [0], [1], [0, 0, 1, 1], [], []>} : vector<16x32xf32>, vector<32x64xf32>, vector<16x64xf32> -> vector<16x64xf32>
    %c0_3 = arith.constant 0 : index
    %c0_4 = arith.constant 0 : index
    %3 = vector.load %arg3[%c0_3, %c0_4] : memref<1x64xf32, #tpu.memory_space<vmem>>, vector<1x64xf32>
    %4 = vector.broadcast %3 : vector<1x64xf32> to vector<16x64xf32>
    %5 = arith.addf %2, %4 : vector<16x64xf32>
    %cst_5 = arith.constant 5.000000e-01 : f32
    %6 = vector.broadcast %cst_5 : f32 to vector<16x64xf32>
    %7 = arith.mulf %6, %5 : vector<16x64xf32>
    %cst_6 = arith.constant 0.707106769 : f32
    %8 = vector.broadcast %cst_6 : f32 to vector<16x64xf32>
    %9 = arith.mulf %5, %8 : vector<16x64xf32>
    %10 = math.erf %9 : vector<16x64xf32>
    %cst_7 = arith.constant 1.000000e+00 : f32
    %11 = vector.broadcast %cst_7 : f32 to vector<16x64xf32>
    %12 = arith.addf %11, %10 : vector<16x64xf32>
    %13 = arith.mulf %7, %12 : vector<16x64xf32>
    %c0_8 = arith.constant 0 : index
    %c0_9 = arith.constant 0 : index
    %14 = vector.load %arg4[%c0_8, %c0_9] : memref<64x128xf32, #tpu.memory_space<vmem>>, vector<64x128xf32>
    %cst_10 = arith.constant dense<0.000000e+00> : vector<16x128xf32>
    %15 = tpu.matmul %13, %14, %cst_10 {dimension_numbers = #tpu.dot_dimension_numbers<[1], [0], [0], [1], [0, 0, 1, 1], [], []>} : vector<16x64xf32>, vector<64x128xf32>, vector<16x128xf32> -> vector<16x128xf32>
    %c0_11 = arith.constant 0 : index
    %c0_12 = arith.constant 0 : index
    %16 = vector.load %arg5[%c0_11, %c0_12] : memref<1x128xf32, #tpu.memory_space<vmem>>, vector<1x128xf32>
    %17 = vector.broadcast %16 : vector<1x128xf32> to vector<16x128xf32>
    %18 = arith.addf %15, %17 : vector<16x128xf32>
    %c0_13 = arith.constant 0 : index
    %c0_14 = arith.constant 0 : index
    %19 = vector.load %arg6[%c0_13, %c0_14] : memref<16x128xf32, #tpu.memory_space<vmem>>, vector<16x128xf32>
    tpu.vector_store %arg6[%c0_13, %c0_14], %18 {strides = array<i32>} : memref<16x128xf32, #tpu.memory_space<vmem>>, vector<16x128xf32>,
    return
  }
  func.func @transform_0(%arg0: i32) -> (i32, i32) {
    %c0_i32 = arith.constant 0 : i32
    %c0_i32_0 = arith.constant 0 : i32
    return %arg0, %c0_i32 : i32, i32
  }
  func.func @transform_1(%arg0: i32) -> (i32, i32) {
    %c0_i32 = arith.constant 0 : i32
    %c0_i32_0 = arith.constant 0 : i32
    %c0_i32_1 = arith.constant 0 : i32
    return %c0_i32, %c0_i32_0 : i32, i32
  }
  func.func @transform_2(%arg0: i32) -> (i32, i32) {
    %c0_i32 = arith.constant 0 : i32
    %c0_i32_0 = arith.constant 0 : i32
    %c0_i32_1 = arith.constant 0 : i32
    return %c0_i32, %c0_i32_0 : i32, i32
  }
  func.func @transform_3(%arg0: i32) -> (i32, i32) {
    %c0_i32 = arith.constant 0 : i32
    %c0_i32_0 = arith.constant 0 : i32
    %c0_i32_1 = arith.constant 0 : i32
    return %c0_i32, %c0_i32_0 : i32, i32
  }
  func.func @transform_4(%arg0: i32) -> (i32, i32) {
    %c0_i32 = arith.constant 0 : i32
    %c0_i32_0 = arith.constant 0 : i32
    %c0_i32_1 = arith.constant 0 : i32
    return %c0_i32, %c0_i32_0 : i32, i32
  }
  func.func @transform_5(%arg0: i32) -> (i32, i32) {
    %c0_i32 = arith.constant 0 : i32
    %c0_i32_0 = arith.constant 0 : i32
    return %arg0, %c0_i32 : i32, i32
  }
}

</mosaic_0001>

<llo_original>
// kernel: tpu_custom_call.1
$region0: #{tpu_custom_call.1}
  #allocation0 [shape = 'u32[]', space=smem, size = 0x4, offset = 0x4, fixed_abs, tag = 'smem constant byte address 0x4 - core index']
  #allocation1 [shape = 'u32[144,128]{1,0:T(1,128)}', space=vmem, size = 0x12000, scoped, tag = 'internal scratch']
  %s0 = inlined_call_operand.hbm [shape: f32[16,32], index: 0, kind: input, shape index: {}]
  %s1 = inlined_call_operand.hbm [shape: f32[32,64], index: 1, kind: input, shape index: {}]
  %s2 = inlined_call_operand.vmem [shape: f32[1,64], index: 2, kind: input, shape index: {}]
  %s3 = inlined_call_operand.hbm [shape: f32[64,128], index: 3, kind: input, shape index: {}]
  %s4 = inlined_call_operand.vmem [shape: f32[1,128], index: 4, kind: input, shape index: {}]
  %s5 = inlined_call_operand.hbm [shape: f32[16,128], index: 5, kind: output, shape index: {}]
  %s6 = sld [smem:[#allocation0]]
  $region42: #{tpu_custom_call.1} parent=0
    _
  %s8 = ssub.s32 1, %s6
  %s9 = scalar_select 0, %s8, %s6
  $region1: #{tpu_custom_call.1} parent=0
    #allocation2 [shape = 'u8[8192]{0}', space=vmem, size = 0x2000, scoped, tag = 'input window, operand 0, single buffered']
    #allocation3 [shape = 's32[1]{0}', space=sflag, size = 0x4, scoped, tag = 'scoped memory for tpu_custom_call.1']
    #allocation4 [shape = 's32[1]{0}', space=sflag, size = 0x4, scoped, tag = 'scoped memory for tpu_custom_call.1']
    #allocation5 [shape = 'u8[16384]{0}', space=vmem, size = 0x4000, scoped, tag = 'input window, operand 1, single buffered']
    #allocation6 [shape = 's32[1]{0}', space=sflag, size = 0x4, scoped, tag = 'scoped memory for tpu_custom_call.1']
    #allocation7 [shape = 'u8[32768]{0}', space=vmem, size = 0x8000, scoped, tag = 'input window, operand 3, single buffered']
    #allocation8 [shape = 'u8[8192]{0}', space=vmem, size = 0x2000, scoped, tag = 'output window, operand 0, single buffered']
    %10 = vsyncpa [#allocation3], 0
    %11 = vsyncpa [#allocation6], 0
    %12 = vsyncpa [#allocation4], 0
    // Predicated region
    $region2: #{tpu_custom_call.1} parent=1 // pred_check
      _
    $region3: #{tpu_custom_call.1} parent=1 // pred_check_branch
      %14 = sbr.rel (0) target = $region5
    $region4: #{tpu_custom_call.1} parent=1 // pred_region
      %s16 = ssub.s32 256, 256
      %17 = vsyncadd [#allocation3], %s16
      %s18 = sshll.u32 [#allocation2], 4
      %s19 = int_to_ptr.vmem [resolvable:$true] %s18
      %24 = dma.hbm_to_vmem [thread:$0]  %s0, 256, %s19, [#allocation3], 128, 128, 8
    $region5: #{tpu_custom_call.1} parent=1 // pred_fallthru
      _
    // Predicated region
    $region6: #{tpu_custom_call.1} parent=1 // pred_check
      _
    $region7: #{tpu_custom_call.1} parent=1 // pred_check_branch
      %26 = sbr.rel (0) target = $region9
    $region8: #{tpu_custom_call.1} parent=1 // pred_region
      %s28 = ssub.s32 512, 512
      %29 = vsyncadd [#allocation6], %s28
      %s30 = sshll.u32 [#allocation5], 4
      %s31 = int_to_ptr.vmem [resolvable:$true] %s30
      %36 = dma.hbm_to_vmem [thread:$0]  %s1, 512, %s31, [#allocation6], 128, 128, 8
    $region9: #{tpu_custom_call.1} parent=1 // pred_fallthru
      _
    // Predicated region
    $region10: #{tpu_custom_call.1} parent=1 // pred_check
      _
    $region11: #{tpu_custom_call.1} parent=1 // pred_check_branch
      %38 = sbr.rel (0) target = $region13
    $region12: #{tpu_custom_call.1} parent=1 // pred_region
      _
    $region13: #{tpu_custom_call.1} parent=1 // pred_fallthru
      _
    // Predicated region
    $region14: #{tpu_custom_call.1} parent=1 // pred_check
      _
    $region15: #{tpu_custom_call.1} parent=1 // pred_check_branch
      %40 = sbr.rel (0) target = $region17
    $region16: #{tpu_custom_call.1} parent=1 // pred_region
      %s42 = ssub.s32 1024, 1024
      %43 = vsyncadd [#allocation6], %s42
      %s44 = sshll.u32 [#allocation7], 4
      %s45 = int_to_ptr.vmem [resolvable:$true] %s44
      %50 = dma.hbm_to_vmem [thread:$0]  %s3, 1024, %s45, [#allocation6], 128, 128, 8
    $region17: #{tpu_custom_call.1} parent=1 // pred_fallthru
      _
    // Predicated region
    $region18: #{tpu_custom_call.1} parent=1 // pred_check
      _
    $region19: #{tpu_custom_call.1} parent=1 // pred_check_branch
      %52 = sbr.rel (0) target = $region21
    $region20: #{tpu_custom_call.1} parent=1 // pred_region
      _
    $region21: #{tpu_custom_call.1} parent=1 // pred_fallthru
      _
    // Predicated region
    $region22: #{tpu_custom_call.1} parent=1 // pred_check
      _
    $region23: #{tpu_custom_call.1} parent=1 // pred_check_branch
      %54 = sbr.rel (0) target = $region25
    $region24: #{tpu_custom_call.1} parent=1 // pred_region
      %55 = dma.done [#allocation3], 256
    $region25: #{tpu_custom_call.1} parent=1 // pred_fallthru
      _
    // Predicated region
    $region26: #{tpu_custom_call.1} parent=1 // pred_check
      _
    $region27: #{tpu_custom_call.1} parent=1 // pred_check_branch
      %57 = sbr.rel (0) target = $region29
    $region28: #{tpu_custom_call.1} parent=1 // pred_region
      %58 = dma.done [#allocation6], 512
    $region29: #{tpu_custom_call.1} parent=1 // pred_fallthru
      _
    // Predicated region
    $region30: #{tpu_custom_call.1} parent=1 // pred_check
      _
    $region31: #{tpu_custom_call.1} parent=1 // pred_check_branch
      %60 = sbr.rel (0) target = $region33
    $region32: #{tpu_custom_call.1} parent=1 // pred_region
      %61 = dma.done [#allocation6], 1024
    $region33: #{tpu_custom_call.1} parent=1 // pred_fallthru
      _
    %v62 = vld [vmem:[#allocation2] sm:$0xff]
    %v63 = vld [vmem:[#allocation2 + $0x8] sm:$0xff]
    %v64 = vld [vmem:[#allocation5] sm:$0xff]
    %v65 = vld [vmem:[#allocation5 + $0x8] sm:$0xff]
    %v66 = vld [vmem:[#allocation5 + $0x10] sm:$0xff]
    %v67 = vld [vmem:[#allocation5 + $0x18] sm:$0xff]
    %v68 = vld [vmem:[%s2] sm:$0x1]
    %v70 = vlaneseq
    %v71 = vshrl.u32 %v70, 7
    %v72 = vsub.s32 0, %v71
    %v73 = vrot.slane %v68, %v72
    %vm75 = vcmask 261120
    %v77 = vsel %vm75, %v62, 0
    %v80 = vsel %vm75, %v63, 0
    %82 = vmatprep.subr.mxu0 0.0
    %83 = vmatpush1.msra.mxu0 0.0
    %84 = vmatprep.subr.mxu0 0.0
    %85 = vmatpush1.msra.mxu0 0.0
    %86 = vmatprep.subr.mxu0 0.0
    %87 = vmatpush1.msra.mxu0 0.0
    %88 = vmatprep.subr.mxu0 0.0
    %89 = vmatpush1.msra.mxu0 0.0
    %90 = vmatprep.subr.mxu0 0.0
    %91 = vmatpush1.msra.mxu0 0.0
    %92 = vmatprep.subr.mxu0 0.0
    %93 = vmatpush1.msra.mxu0 0.0
    %94 = vmatprep.subr.mxu0 0.0
    %95 = vmatpush1.msra.mxu0 0.0
    %96 = vmatprep.subr.mxu0 0.0
    %97 = vmatpush1.msra.mxu0 0.0
    %98 = vmatprep.subr.mxu0 0.0
    %99 = vmatpush1.msra.mxu0 0.0
    %100 = vmatprep.subr.mxu0 0.0
    %101 = vmatpush1.msra.mxu0 0.0
    %102 = vmatprep.subr.mxu0 0.0
    %103 = vmatpush1.msra.mxu0 0.0
    %104 = vmatprep.subr.mxu0 0.0
    %105 = vmatpush1.msra.mxu0 0.0
    %106 = vmatprep.subr.mxu0 0.0
    %107 = vmatpush1.msra.mxu0 %v67
    %108 = vmatprep.subr.mxu0 0.0
    %109 = vmatpush1.msra.mxu0 %v66
    %110 = vmatprep.subr.mxu0 0.0
    %111 = vmatpush1.msra.mxu0 %v65
    %112 = vmatprep.subr.mxu0 0.0
    %113 = vmatpush1.msra.mxu0 %v64
    %114 = vmatprep.subr.mxu0 0.0
    %115 = vmatpush2.msra.mxu0 0.0
    %116 = vmatprep.subr.mxu0 0.0
    %117 = vmatpush2.msra.mxu0 0.0
    %118 = vmatprep.subr.mxu0 0.0
    %119 = vmatpush2.msra.mxu0 0.0
    %120 = vmatprep.subr.mxu0 0.0
    %121 = vmatpush2.msra.mxu0 0.0
    %122 = vmatprep.subr.mxu0 0.0
    %123 = vmatpush2.msra.mxu0 0.0
    %124 = vmatprep.subr.mxu0 0.0
    %125 = vmatpush2.msra.mxu0 0.0
    %126 = vmatprep.subr.mxu0 0.0
    %127 = vmatpush2.msra.mxu0 0.0
    %128 = vmatprep.subr.mxu0 0.0
    %129 = vmatpush2.msra.mxu0 0.0
    %130 = vmatprep.subr.mxu0 0.0
    %131 = vmatpush2.msra.mxu0 0.0
    %132 = vmatprep.subr.mxu0 0.0
    %133 = vmatpush2.msra.mxu0 0.0
    %134 = vmatprep.subr.mxu0 0.0
    %135 = vmatpush2.msra.mxu0 0.0
    %136 = vmatprep.subr.mxu0 0.0
    %137 = vmatpush2.msra.mxu0 0.0
    %138 = vmatprep.subr.mxu0 0.0
    %139 = vmatpush2.msra.mxu0 0.0
    %140 = vmatprep.subr.mxu0 0.0
    %141 = vmatpush2.msra.mxu0 0.0
    %142 = vmatprep.subr.mxu0 0.0
    %143 = vmatpush2.msra.mxu0 0.0
    %144 = vmatprep.subr.mxu0 0.0
    %145 = vmatpush2.msra.mxu0 0.0
    %146 = vmatprep.mubr.f32.mxu0 0.0
    %147 = vmatmul.mubr.f32.gmra.mxu0 %v77
    %v148 = vpop.f32.mrf.mxu0
    %v149 = vadd.f32 %v73, %v148
    %v150 = vpop.f32.mrf.mxu0
    %151 = vmatprep.mubr.f32.mxu0 0.0
    %152 = vmatmul.mubr.f32.gmra.mxu0 %v80
    %v153 = vpop.f32.mrf.mxu0
    %v154 = vadd.f32 %v73, %v153
    %v155 = vpop.f32.mrf.mxu0
    %156 = vdwg.mxu0
    %v157 = vmul.f32 %v149, 0.5
    %v158 = vmul.f32 %v154, 0.5
    %v159 = vmul.f32 %v149, 0.70710677
    %v160 = vmul.f32 %v154, 0.70710677
    %v161 = verf.f32.pop %v159
    %v162 = verf.f32.pop %v160
    %v163 = vadd.f32 %v161, 1.0
    %v164 = vadd.f32 %v162, 1.0
    %v165 = vmul.f32 %v157, %v163
    %v166 = vmul.f32 %v158, %v164
    %v167 = vld [vmem:[#allocation7] sm:$0xff]
    %v168 = vld [vmem:[#allocation7 + $0x8] sm:$0xff]
    %v169 = vld [vmem:[#allocation7 + $0x10] sm:$0xff]
    %v170 = vld [vmem:[#allocation7 + $0x18] sm:$0xff]
    %v171 = vld [vmem:[#allocation7 + $0x20] sm:$0xff]
    %v172 = vld [vmem:[#allocation7 + $0x28] sm:$0xff]
    %v173 = vld [vmem:[#allocation7 + $0x30] sm:$0xff]
    %v174 = vld [vmem:[#allocation7 + $0x38] sm:$0xff]
    %v175 = vld [vmem:[%s4] sm:$0x1]
    %v177 = vlaneseq
    %v178 = vshrl.u32 %v177, 7
    %v179 = vsub.s32 0, %v178
    %v180 = vrot.slane %v175, %v179
    %vm182 = vcmask 523264
    %v184 = vsel %vm182, %v165, 0
    %v187 = vsel %vm182, %v166, 0
    %189 = vmatprep.subr.mxu0 0.0
    %190 = vmatpush1.msra.mxu0 0.0
    %191 = vmatprep.subr.mxu0 0.0
    %192 = vmatpush1.msra.mxu0 0.0
    %193 = vmatprep.subr.mxu0 0.0
    %194 = vmatpush1.msra.mxu0 0.0
    %195 = vmatprep.subr.mxu0 0.0
    %196 = vmatpush1.msra.mxu0 0.0
    %197 = vmatprep.subr.mxu0 0.0
    %198 = vmatpush1.msra.mxu0 0.0
    %199 = vmatprep.subr.mxu0 0.0
    %200 = vmatpush1.msra.mxu0 0.0
    %201 = vmatprep.subr.mxu0 0.0
    %202 = vmatpush1.msra.mxu0 0.0
    %203 = vmatprep.subr.mxu0 0.0
    %204 = vmatpush1.msra.mxu0 0.0
    %205 = vmatprep.subr.mxu0 0.0
    %206 = vmatpush1.msra.mxu0 %v174
    %207 = vmatprep.subr.mxu0 0.0
    %208 = vmatpush1.msra.mxu0 %v173
    %209 = vmatprep.subr.mxu0 0.0
    %210 = vmatpush1.msra.mxu0 %v172
    %211 = vmatprep.subr.mxu0 0.0
    %212 = vmatpush1.msra.mxu0 %v171
    %213 = vmatprep.subr.mxu0 0.0
    %214 = vmatpush1.msra.mxu0 %v170
    %215 = vmatprep.subr.mxu0 0.0
    %216 = vmatpush1.msra.mxu0 %v169
    %217 = vmatprep.subr.mxu0 0.0
    %218 = vmatpush1.msra.mxu0 %v168
    %219 = vmatprep.subr.mxu0 0.0
    %220 = vmatpush1.msra.mxu0 %v167
    %221 = vmatprep.subr.mxu0 0.0
    %222 = vmatpush2.msra.mxu0 0.0
    %223 = vmatprep.subr.mxu0 0.0
    %224 = vmatpush2.msra.mxu0 0.0
    %225 = vmatprep.subr.mxu0 0.0
    %226 = vmatpush2.msra.mxu0 0.0
    %227 = vmatprep.subr.mxu0 0.0
    %228 = vmatpush2.msra.mxu0 0.0
    %229 = vmatprep.subr.mxu0 0.0
    %230 = vmatpush2.msra.mxu0 0.0
    %231 = vmatprep.subr.mxu0 0.0
    %232 = vmatpush2.msra.mxu0 0.0
    %233 = vmatprep.subr.mxu0 0.0
    %234 = vmatpush2.msra.mxu0 0.0
    %235 = vmatprep.subr.mxu0 0.0
    %236 = vmatpush2.msra.mxu0 0.0
    %237 = vmatprep.subr.mxu0 0.0
    %238 = vmatpush2.msra.mxu0 0.0
    %239 = vmatprep.subr.mxu0 0.0
    %240 = vmatpush2.msra.mxu0 0.0
    %241 = vmatprep.subr.mxu0 0.0
    %242 = vmatpush2.msra.mxu0 0.0
    %243 = vmatprep.subr.mxu0 0.0
    %244 = vmatpush2.msra.mxu0 0.0
    %245 = vmatprep.subr.mxu0 0.0
    %246 = vmatpush2.msra.mxu0 0.0
    %247 = vmatprep.subr.mxu0 0.0
    %248 = vmatpush2.msra.mxu0 0.0
    %249 = vmatprep.subr.mxu0 0.0
    %250 = vmatpush2.msra.mxu0 0.0
    %251 = vmatprep.subr.mxu0 0.0
    %252 = vmatpush2.msra.mxu0 0.0
    %253 = vmatprep.mubr.f32.mxu0 0.0
    %254 = vmatmul.mubr.f32.gmra.mxu0 %v184
    %v255 = vpop.f32.mrf.mxu0
    %v256 = vadd.f32 %v180, %v255
    %v257 = vpop.f32.mrf.mxu0
    %258 = vmatprep.mubr.f32.mxu0 0.0
    %259 = vmatmul.mubr.f32.gmra.mxu0 %v187
    %v260 = vpop.f32.mrf.mxu0
    %v261 = vadd.f32 %v180, %v260
    %v262 = vpop.f32.mrf.mxu0
    %263 = vdwg.mxu0
    %264 = vst [vmem:[#allocation8] sm:$0xff] %v256
    %265 = vst [vmem:[#allocation8 + $0x8] sm:$0xff] %v261
    // Predicated region
    $region34: #{tpu_custom_call.1} parent=1 // pred_check
      _
    $region35: #{tpu_custom_call.1} parent=1 // pred_check_branch
      %267 = sbr.rel (0) target = $region37
    $region36: #{tpu_custom_call.1} parent=1 // pred_region
      %s269 = ssub.s32 256, 256
      %270 = vsyncadd [#allocation4], %s269
      %s271 = sshll.u32 [#allocation8], 4
      %s272 = int_to_ptr.vmem [resolvable:$true] %s271
      %277 = dma.vmem_to_hbm [thread:$0]  %s272, 256, %s5, [#allocation4], 128, 128, 8
    $region37: #{tpu_custom_call.1} parent=1 // pred_fallthru
      _
    // Predicated region
    $region38: #{tpu_custom_call.1} parent=1 // pred_check
      _
    $region39: #{tpu_custom_call.1} parent=1 // pred_check_branch
      %279 = sbr.rel (0) target = $region41
    $region40: #{tpu_custom_call.1} parent=1 // pred_region
      %280 = dma.done [#allocation4], 256
    $region41: #{tpu_custom_call.1} parent=1 // pred_fallthru
      _
    %281 = vsyncpa [#allocation3], 1
    %282 = vsyncpa [#allocation6], 1
    %283 = vsyncpa [#allocation4], 1

</llo_original>
